<compile_context>
chip_gen: v7x
topology: tpu7x:2x2x1
jax: 0.10.0
libtpu: 0.0.40
codegen_flags: <defaults>
</compile_context>

<pallas_src>
import functools

import jax
import jax.numpy as jnp
from jax import lax
from jax.experimental import pallas as pl
from jax.experimental.pallas import tpu as pltpu


def _round_up(x: int, m: int) -> int:
    return ((x + m - 1) // m) * m


def _sampled_xent_kernel(logit_ref, loss_ref, m_scr, l_scr, d_scr, *,
                         n_valid: int, tile: int, n_col_tiles: int):
    """One (tile, tile) block of the (B_pad, B_pad) logit matrix.

    Grid: (row_tile i [parallel], col_tile k [arbitrary reduction, last]).
    Scratch (persists across the inner k loop for a fixed row tile):
      m_scr, l_scr: (tile, 1) f32 running max / running exp-sum.
      d_scr:        (tile, 1) f32 diagonal logit for this row tile.
    """
    i = pl.program_id(0)   # row-tile index
    k = pl.program_id(1)   # column-tile index (reduction axis, innermost)

    # ---- init running stats at the first column tile ----
    @pl.when(k == 0)
    def _():
        m_scr[...] = jnp.full_like(m_scr, -jnp.inf)
        l_scr[...] = jnp.zeros_like(l_scr)
        d_scr[...] = jnp.zeros_like(d_scr)

    # Block arrives in the input dtype (bf16 streams at half the HBM bytes);
    # compute in f32 (v5e has no bf16 VPU/EUP path).
    x = logit_ref[...].astype(jnp.float32)                       # (tile, tile)

    # Mask padded columns out of the softmax sum (static no-op when B % tile == 0).
    if n_valid % tile != 0:
        col = lax.broadcasted_iota(jnp.int32, (1, tile), 1) + k * tile
        x_masked = jnp.where(col < n_valid, x, -jnp.inf)
    else:
        x_masked = x

    # ---- online logsumexp update ----
    tile_max = jnp.max(x_masked, axis=-1, keepdims=True)         # (tile, 1)
    m_new = jnp.maximum(m_scr[...], tile_max)                    # finite: every
    alpha = jnp.exp(m_scr[...] - m_new)                          # tile has >=1
    p = jnp.exp(x_masked - m_new)                                # valid column
    l_scr[...] = alpha * l_scr[...] + jnp.sum(p, axis=-1, keepdims=True)
    m_scr[...] = m_new

    # ---- diagonal logit: only diagonal tiles carry it ----
    @pl.when(i == k)
    def _():
        row_io = lax.broadcasted_iota(jnp.int32, (tile, 1), 0)
        col_io = lax.broadcasted_iota(jnp.int32, (1, tile), 1)
        d_scr[...] = jnp.sum(jnp.where(row_io == col_io, x, 0.0),
                             axis=-1, keepdims=True)

    # ---- finalize per-row loss on the last column tile ----
    @pl.when(k == n_col_tiles - 1)
    def _():
        lse = jnp.log(l_scr[...]) + m_scr[...]
        loss_ref[...] = lse - d_scr[...]


def sampled_cross_entropy_loss(logit: jax.Array, *, tile: int | None = None) -> jax.Array:
    """Pallas implementation of SampledCrossEntropyLoss.forward.

    Args:
      logit: (B, B) array (batch_size == n_classes, any float dtype).
      tile:  optional square tile size (multiple of 128). Default: 512 for
             large B, the padded size for small B.
    Returns:
      scalar float32 loss.
    """
    n_rows, n_cols = logit.shape
    assert n_rows == n_cols, "SampledCrossEntropyLoss requires n_classes == batch_size"
    b = n_cols

    # Square tiles, lane-aligned. 512x512 f32 = 1 MiB/block (2 MiB double
    # buffered) -> safe under default scoped VMEM on v5e/v6e/v7x.
    if tile is None:
        tile = min(512, _round_up(b, 128))
    tile = max(128, _round_up(tile, 128))

    b_pad = _round_up(b, tile)
    if b_pad != b:
        logit = jnp.pad(logit, ((0, b_pad - b), (0, b_pad - b)))

    n_row_tiles = b_pad // tile
    n_col_tiles = b_pad // tile

    kernel = functools.partial(
        _sampled_xent_kernel, n_valid=b, tile=tile, n_col_tiles=n_col_tiles)

    itemsize = jnp.dtype(logit.dtype).itemsize
    cost = pl.CostEstimate(
        flops=6 * b * b,
        transcendentals=b * b,
        bytes_accessed=b * b * itemsize + 4 * b_pad,
    )

    per_row = pl.pallas_call(
        kernel,
        out_shape=jax.ShapeDtypeStruct((b_pad, 1), jnp.float32),
        grid_spec=pltpu.PrefetchScalarGridSpec(
            num_scalar_prefetch=0,
            grid=(n_row_tiles, n_col_tiles),
            in_specs=[pl.BlockSpec((tile, tile), lambda i, k: (i, k))],
            out_specs=pl.BlockSpec((tile, 1), lambda i, k: (i, 0)),
            scratch_shapes=[pltpu.VMEM((tile, 1), jnp.float32)] * 3,
        ),
        compiler_params=pltpu.CompilerParams(
            dimension_semantics=("parallel", "arbitrary")),
        cost_estimate=cost,
    )(logit)

    # Tiny epilogue in XLA: drop padded rows, mean over the true batch.
    return jnp.mean(per_row[:b, 0])


def _reference(logit: jax.Array) -> jax.Array:
    # Pure-JAX reference identical to nn.CrossEntropyLoss(logit, arange(B)).
    logp = jax.nn.log_softmax(logit.astype(jnp.float32), axis=-1)
    b = logit.shape[0]
    return -jnp.mean(logp[jnp.arange(b), jnp.arange(b)])


if __name__ == "__main__":
    key = jax.random.PRNGKey(0)
    k0, k1 = jax.random.split(key)

    # Small shape consistent with the module: batch == n_classes == 8.
    b = 8
    logit = jax.random.normal(k0, (b, b), dtype=jnp.float32)
    loss = jax.block_until_ready(sampled_cross_entropy_loss(logit))
    ref = _reference(logit)
    assert jnp.allclose(loss, ref, atol=1e-5, rtol=1e-5), (loss, ref)

    # Exercise the tiled path: grid (2, 2), online logsumexp across column
    # tiles, diagonal-tile gating, and column/row padding masks (200 % 128 != 0).
    b2 = 200
    logit2 = jax.random.normal(k1, (b2, b2), dtype=jnp.float32)
    loss2 = jax.block_until_ready(sampled_cross_entropy_loss(logit2, tile=128))
    ref2 = _reference(logit2)
    assert jnp.allclose(loss2, ref2, atol=1e-4, rtol=1e-4), (loss2, ref2)

    print("KERNEL_OK")
</pallas_src>

<mosaic_0001>
module attributes {stable_mosaic.version = 11 : i64} {
  func.func @_sampled_xent_kernel(%arg0: i32, %arg1: i32, %arg2: memref<128x128xf32, #tpu.memory_space<vmem>>, %arg3: memref<128x1xf32, #tpu.memory_space<vmem>>, %arg4: memref<128x1xf32, #tpu.memory_space<vmem>>, %arg5: memref<128x1xf32, #tpu.memory_space<vmem>>, %arg6: memref<128x1xf32, #tpu.memory_space<vmem>>) attributes {dimension_semantics = [#tpu.dimension_semantics<parallel>, #tpu.dimension_semantics<arbitrary>], iteration_bounds = array<i64: 1, 1>, scalar_prefetch = 0 : i64, scratch_operands = 3 : i64, tpu.core_type = #tpu.core_type<tc>, window_params = [{transform_indices = @transform_0, window_bounds = array<i64: 128, 128>}, {transform_indices = @transform_1, window_bounds = array<i64: 128, 1>}]} {
    %c0_i32 = arith.constant 0 : i32
    %0 = arith.cmpi eq, %arg1, %c0_i32 : i32
    %1 = arith.extui %0 : i1 to i32
    %c0_i32_0 = arith.constant 0 : i32
    %2 = arith.cmpi ne, %1, %c0_i32_0 : i32
    scf.if %2 {
      %cst_17 = arith.constant 0xFF800000 : f32
      %37 = vector.broadcast %cst_17 : f32 to vector<128x1xf32>
      %c0_18 = arith.constant 0 : index
      %c0_19 = arith.constant 0 : index
      %38 = vector.load %arg4[%c0_18, %c0_19] : memref<128x1xf32, #tpu.memory_space<vmem>>, vector<128x1xf32>
      tpu.vector_store %arg4[%c0_18, %c0_19], %37 {strides = array<i32>} : memref<128x1xf32, #tpu.memory_space<vmem>>, vector<128x1xf32>,
      %cst_20 = arith.constant 0.000000e+00 : f32
      %39 = vector.broadcast %cst_20 : f32 to vector<128x1xf32>
      %c0_21 = arith.constant 0 : index
      %c0_22 = arith.constant 0 : index
      %40 = vector.load %arg5[%c0_21, %c0_22] : memref<128x1xf32, #tpu.memory_space<vmem>>, vector<128x1xf32>
      tpu.vector_store %arg5[%c0_21, %c0_22], %39 {strides = array<i32>} : memref<128x1xf32, #tpu.memory_space<vmem>>, vector<128x1xf32>,
      %cst_23 = arith.constant 0.000000e+00 : f32
      %41 = vector.broadcast %cst_23 : f32 to vector<128x1xf32>
      %c0_24 = arith.constant 0 : index
      %c0_25 = arith.constant 0 : index
      %42 = vector.load %arg6[%c0_24, %c0_25] : memref<128x1xf32, #tpu.memory_space<vmem>>, vector<128x1xf32>
      tpu.vector_store %arg6[%c0_24, %c0_25], %41 {strides = array<i32>} : memref<128x1xf32, #tpu.memory_space<vmem>>, vector<128x1xf32>,
    } else {
    }
    %c0 = arith.constant 0 : index
    %c0_1 = arith.constant 0 : index
    %3 = vector.load %arg2[%c0, %c0_1] : memref<128x128xf32, #tpu.memory_space<vmem>>, vector<128x128xf32>
    %4 = tpu.iota {dimensions = array<i32: 1>} : vector<1x128xi32>
    %c128_i32 = arith.constant 128 : i32
    %5 = arith.muli %arg1, %c128_i32 : i32
    %6 = vector.broadcast %5 : i32 to vector<1x128xi32>
    %7 = arith.addi %4, %6 : vector<1x128xi32>
    %c8_i32 = arith.constant 8 : i32
    %8 = vector.broadcast %c8_i32 : i32 to vector<1x128xi32>
    %9 = arith.cmpi slt, %7, %8 : vector<1x128xi32>
    %cst = arith.constant 0xFF800000 : f32
    %10 = vector.shape_cast %9 : vector<1x128xi1> to vector<1x128xi1>
    %11 = vector.broadcast %10 : vector<1x128xi1> to vector<128x128xi1>
    %12 = vector.broadcast %cst : f32 to vector<128x128xf32>
    %13 = arith.select %11, %3, %12 : vector<128x128xi1>, vector<128x128xf32>
    %cst_2 = arith.constant dense<0xFF800000> : vector<128xf32>
    %14 = vector.multi_reduction <maximumf>, %13, %cst_2 [1] : vector<128x128xf32> to vector<128xf32>
    %15 = vector.shape_cast %14 : vector<128xf32> to vector<128x1xf32>
    %c0_3 = arith.constant 0 : index
    %c0_4 = arith.constant 0 : index
    %16 = vector.load %arg4[%c0_3, %c0_4] : memref<128x1xf32, #tpu.memory_space<vmem>>, vector<128x1xf32>
    %17 = arith.maximumf %16, %15 : vector<128x1xf32>
    %c0_5 = arith.constant 0 : index
    %c0_6 = arith.constant 0 : index
    %18 = vector.load %arg4[%c0_5, %c0_6] : memref<128x1xf32, #tpu.memory_space<vmem>>, vector<128x1xf32>
    %19 = arith.subf %18, %17 : vector<128x1xf32>
    %20 = math.exp %19 : vector<128x1xf32>
    %21 = vector.broadcast %17 : vector<128x1xf32> to vector<128x128xf32>
    %22 = arith.subf %13, %21 : vector<128x128xf32>
    %23 = math.exp %22 : vector<128x128xf32>
    %c0_7 = arith.constant 0 : index
    %c0_8 = arith.constant 0 : index
    %24 = vector.load %arg5[%c0_7, %c0_8] : memref<128x1xf32, #tpu.memory_space<vmem>>, vector<128x1xf32>
    %25 = arith.mulf %20, %24 : vector<128x1xf32>
    %cst_9 = arith.constant dense<0.000000e+00> : vector<128xf32>
    %26 = vector.multi_reduction <add>, %23, %cst_9 [1] : vector<128x128xf32> to vector<128xf32>
    %27 = vector.shape_cast %26 : vector<128xf32> to vector<128x1xf32>
    %28 = arith.addf %25, %27 : vector<128x1xf32>
    %c0_10 = arith.constant 0 : index
    %c0_11 = arith.constant 0 : index
    %29 = vector.load %arg5[%c0_10, %c0_11] : memref<128x1xf32, #tpu.memory_space<vmem>>, vector<128x1xf32>
    tpu.vector_store %arg5[%c0_10, %c0_11], %28 {strides = array<i32>} : memref<128x1xf32, #tpu.memory_space<vmem>>, vector<128x1xf32>,
    %c0_12 = arith.constant 0 : index
    %c0_13 = arith.constant 0 : index
    %30 = vector.load %arg4[%c0_12, %c0_13] : memref<128x1xf32, #tpu.memory_space<vmem>>, vector<128x1xf32>
    tpu.vector_store %arg4[%c0_12, %c0_13], %17 {strides = array<i32>} : memref<128x1xf32, #tpu.memory_space<vmem>>, vector<128x1xf32>,
    %31 = arith.cmpi eq, %arg0, %arg1 : i32
    %32 = arith.extui %31 : i1 to i32
    %c0_i32_14 = arith.constant 0 : i32
    %33 = arith.cmpi ne, %32, %c0_i32_14 : i32
    scf.if %33 {
      %37 = tpu.iota {dimensions = array<i32: 0>} : vector<128x1xi32>
      %38 = tpu.iota {dimensions = array<i32: 1>} : vector<1x128xi32>
      %39 = vector.broadcast %37 : vector<128x1xi32> to vector<128x128xi32>
      %40 = vector.broadcast %38 : vector<1x128xi32> to vector<128x128xi32>
      %41 = arith.cmpi eq, %39, %40 : vector<128x128xi32>
      %cst_17 = arith.constant 0.000000e+00 : f32
      %42 = vector.broadcast %cst_17 : f32 to vector<128x128xf32>
      %43 = arith.select %41, %3, %42 : vector<128x128xi1>, vector<128x128xf32>
      %cst_18 = arith.constant dense<0.000000e+00> : vector<128xf32>
      %44 = vector.multi_reduction <add>, %43, %cst_18 [1] : vector<128x128xf32> to vector<128xf32>
      %45 = vector.shape_cast %44 : vector<128xf32> to vector<128x1xf32>
      %c0_19 = arith.constant 0 : index
      %c0_20 = arith.constant 0 : index
      %46 = vector.load %arg6[%c0_19, %c0_20] : memref<128x1xf32, #tpu.memory_space<vmem>>, vector<128x1xf32>
      tpu.vector_store %arg6[%c0_19, %c0_20], %45 {strides = array<i32>} : memref<128x1xf32, #tpu.memory_space<vmem>>, vector<128x1xf32>,
    } else {
    }
    %c0_i32_15 = arith.constant 0 : i32
    %34 = arith.cmpi eq, %arg1, %c0_i32_15 : i32
    %35 = arith.extui %34 : i1 to i32
    %c0_i32_16 = arith.constant 0 : i32
    %36 = arith.cmpi ne, %35, %c0_i32_16 : i32
    scf.if %36 {
      %c0_17 = arith.constant 0 : index
      %c0_18 = arith.constant 0 : index
      %37 = vector.load %arg5[%c0_17, %c0_18] : memref<128x1xf32, #tpu.memory_space<vmem>>, vector<128x1xf32>
      %38 = math.log %37 : vector<128x1xf32>
      %c0_19 = arith.constant 0 : index
      %c0_20 = arith.constant 0 : index
      %39 = vector.load %arg4[%c0_19, %c0_20] : memref<128x1xf32, #tpu.memory_space<vmem>>, vector<128x1xf32>
      %40 = arith.addf %38, %39 : vector<128x1xf32>
      %c0_21 = arith.constant 0 : index
      %c0_22 = arith.constant 0 : index
      %41 = vector.load %arg6[%c0_21, %c0_22] : memref<128x1xf32, #tpu.memory_space<vmem>>, vector<128x1xf32>
      %42 = arith.subf %40, %41 : vector<128x1xf32>
      %c0_23 = arith.constant 0 : index
      %c0_24 = arith.constant 0 : index
      %43 = vector.load %arg3[%c0_23, %c0_24] : memref<128x1xf32, #tpu.memory_space<vmem>>, vector<128x1xf32>
      tpu.vector_store %arg3[%c0_23, %c0_24], %42 {strides = array<i32>} : memref<128x1xf32, #tpu.memory_space<vmem>>, vector<128x1xf32>,
    } else {
    }
    return
  }
  func.func @transform_0(%arg0: i32, %arg1: i32) -> (i32, i32) {
    %c0_i32 = arith.constant 0 : i32
    return %arg0, %arg1 : i32, i32
  }
  func.func @transform_1(%arg0: i32, %arg1: i32) -> (i32, i32) {
    %c0_i32 = arith.constant 0 : i32
    %c0_i32_0 = arith.constant 0 : i32
    return %arg0, %c0_i32 : i32, i32
  }
}

</mosaic_0001>

<llo_original>
// kernel: tpu_custom_call.1
$region0: #{tpu_custom_call.1}
  #allocation0 [shape = 'u32[]', space=smem, size = 0x4, offset = 0x4, fixed_abs, tag = 'smem constant byte address 0x4 - core index']
  #allocation1 [shape = 'u32[144,128]{1,0:T(1,128)}', space=vmem, size = 0x12000, scoped, tag = 'internal scratch']
  #allocation2 [shape = 'f32[128,1]{1,0:T(8,128)}', space=vmem, size = 0x10000, scoped, tag = 'scratch operand']
  #allocation3 [shape = 'f32[128,1]{1,0:T(8,128)}', space=vmem, size = 0x10000, scoped, tag = 'scratch operand']
  #allocation4 [shape = 'f32[128,1]{1,0:T(8,128)}', space=vmem, size = 0x10000, scoped, tag = 'scratch operand']
  %s0 = inlined_call_operand.hbm [shape: f32[128,128], index: 0, kind: input, shape index: {}]
  %s1 = inlined_call_operand.vmem [shape: f32[128,1], index: 1, kind: output, shape index: {}]
  %s2 = sld [smem:[#allocation0]]
  $region30: #{tpu_custom_call.1} parent=0
    _
  %s4 = ssub.s32 1, %s2
  %s5 = scalar_select 0, %s4, %s2
  $region1: #{tpu_custom_call.1} parent=0
    #allocation5 [shape = 'u8[65536]{0}', space=vmem, size = 0x10000, scoped, tag = 'input window, operand 0, single buffered']
    #allocation6 [shape = 's32[1]{0}', space=sflag, size = 0x4, scoped, tag = 'scoped memory for tpu_custom_call.1']
    %6 = vsyncpa [#allocation6], 0
    // Predicated region
    $region2: #{tpu_custom_call.1} parent=1 // pred_check
      _
    $region3: #{tpu_custom_call.1} parent=1 // pred_check_branch
      %8 = sbr.rel (0) target = $region5
    $region4: #{tpu_custom_call.1} parent=1 // pred_region
      %s10 = ssub.s32 2048, 2048
      %11 = vsyncadd [#allocation6], %s10
      %s12 = sshll.u32 [#allocation5], 4
      %s13 = int_to_ptr.vmem [resolvable:$true] %s12
      %18 = dma.hbm_to_vmem [thread:$0]  %s0, 2048, %s13, [#allocation6], 128, 128, 8
    $region5: #{tpu_custom_call.1} parent=1 // pred_fallthru
      _
    // Predicated region
    $region6: #{tpu_custom_call.1} parent=1 // pred_check
      _
    $region7: #{tpu_custom_call.1} parent=1 // pred_check_branch
      %20 = sbr.rel (0) target = $region9
    $region8: #{tpu_custom_call.1} parent=1 // pred_region
      %21 = dma.done [#allocation6], 2048
    $region9: #{tpu_custom_call.1} parent=1 // pred_fallthru
      _
    %p22 = scmp.eq.s32.totalorder 0, 0
    // Predicated region
    $region10: #{tpu_custom_call.1} parent=1 // pred_check
      %p23 = pneg %p22
    $region11: #{tpu_custom_call.1} parent=1 // pred_check_branch
      %25 = sbr.rel (%p23) target = $region13
    $region12: #{tpu_custom_call.1} parent=1 // pred_region
      %vm26 = vcmask 7168
      %27 = vst.msk [vmem:[#allocation2] sm:$0xff] %vm26, -inf
      %28 = vst.msk [vmem:[#allocation2 + $0x8] sm:$0xff] %vm26, -inf
      %29 = vst.msk [vmem:[#allocation2 + $0x10] sm:$0xff] %vm26, -inf
      %30 = vst.msk [vmem:[#allocation2 + $0x18] sm:$0xff] %vm26, -inf
      %31 = vst.msk [vmem:[#allocation2 + $0x20] sm:$0xff] %vm26, -inf
      %32 = vst.msk [vmem:[#allocation2 + $0x28] sm:$0xff] %vm26, -inf
      %33 = vst.msk [vmem:[#allocation2 + $0x30] sm:$0xff] %vm26, -inf
      %34 = vst.msk [vmem:[#allocation2 + $0x38] sm:$0xff] %vm26, -inf
      %35 = vst.msk [vmem:[#allocation2 + $0x40] sm:$0xff] %vm26, -inf
      %36 = vst.msk [vmem:[#allocation2 + $0x48] sm:$0xff] %vm26, -inf
      %37 = vst.msk [vmem:[#allocation2 + $0x50] sm:$0xff] %vm26, -inf
      %38 = vst.msk [vmem:[#allocation2 + $0x58] sm:$0xff] %vm26, -inf
      %39 = vst.msk [vmem:[#allocation2 + $0x60] sm:$0xff] %vm26, -inf
      %40 = vst.msk [vmem:[#allocation2 + $0x68] sm:$0xff] %vm26, -inf
      %41 = vst.msk [vmem:[#allocation2 + $0x70] sm:$0xff] %vm26, -inf
      %42 = vst.msk [vmem:[#allocation2 + $0x78] sm:$0xff] %vm26, -inf
      %43 = vst.msk [vmem:[#allocation3] sm:$0xff] %vm26, 0.0
      %44 = vst.msk [vmem:[#allocation3 + $0x8] sm:$0xff] %vm26, 0.0
      %45 = vst.msk [vmem:[#allocation3 + $0x10] sm:$0xff] %vm26, 0.0
      %46 = vst.msk [vmem:[#allocation3 + $0x18] sm:$0xff] %vm26, 0.0
      %47 = vst.msk [vmem:[#allocation3 + $0x20] sm:$0xff] %vm26, 0.0
      %48 = vst.msk [vmem:[#allocation3 + $0x28] sm:$0xff] %vm26, 0.0
      %49 = vst.msk [vmem:[#allocation3 + $0x30] sm:$0xff] %vm26, 0.0
      %50 = vst.msk [vmem:[#allocation3 + $0x38] sm:$0xff] %vm26, 0.0
      %51 = vst.msk [vmem:[#allocation3 + $0x40] sm:$0xff] %vm26, 0.0
      %52 = vst.msk [vmem:[#allocation3 + $0x48] sm:$0xff] %vm26, 0.0
      %53 = vst.msk [vmem:[#allocation3 + $0x50] sm:$0xff] %vm26, 0.0
      %54 = vst.msk [vmem:[#allocation3 + $0x58] sm:$0xff] %vm26, 0.0
      %55 = vst.msk [vmem:[#allocation3 + $0x60] sm:$0xff] %vm26, 0.0
      %56 = vst.msk [vmem:[#allocation3 + $0x68] sm:$0xff] %vm26, 0.0
      %57 = vst.msk [vmem:[#allocation3 + $0x70] sm:$0xff] %vm26, 0.0
      %58 = vst.msk [vmem:[#allocation3 + $0x78] sm:$0xff] %vm26, 0.0
      %59 = vst.msk [vmem:[#allocation4] sm:$0xff] %vm26, 0.0
      %60 = vst.msk [vmem:[#allocation4 + $0x8] sm:$0xff] %vm26, 0.0
      %61 = vst.msk [vmem:[#allocation4 + $0x10] sm:$0xff] %vm26, 0.0
      %62 = vst.msk [vmem:[#allocation4 + $0x18] sm:$0xff] %vm26, 0.0
      %63 = vst.msk [vmem:[#allocation4 + $0x20] sm:$0xff] %vm26, 0.0
      %64 = vst.msk [vmem:[#allocation4 + $0x28] sm:$0xff] %vm26, 0.0
      %65 = vst.msk [vmem:[#allocation4 + $0x30] sm:$0xff] %vm26, 0.0
      %66 = vst.msk [vmem:[#allocation4 + $0x38] sm:$0xff] %vm26, 0.0
      %67 = vst.msk [vmem:[#allocation4 + $0x40] sm:$0xff] %vm26, 0.0
      %68 = vst.msk [vmem:[#allocation4 + $0x48] sm:$0xff] %vm26, 0.0
      %69 = vst.msk [vmem:[#allocation4 + $0x50] sm:$0xff] %vm26, 0.0
      %70 = vst.msk [vmem:[#allocation4 + $0x58] sm:$0xff] %vm26, 0.0
      %71 = vst.msk [vmem:[#allocation4 + $0x60] sm:$0xff] %vm26, 0.0
      %72 = vst.msk [vmem:[#allocation4 + $0x68] sm:$0xff] %vm26, 0.0
      %73 = vst.msk [vmem:[#allocation4 + $0x70] sm:$0xff] %vm26, 0.0
      %74 = vst.msk [vmem:[#allocation4 + $0x78] sm:$0xff] %vm26, 0.0
    $region13: #{tpu_custom_call.1} parent=1 // pred_fallthru
      _
    %v75 = vld [vmem:[#allocation5] sm:$0xff]
    %v76 = vld [vmem:[#allocation5 + $0x8] sm:$0xff]
    %v77 = vld [vmem:[#allocation5 + $0x10] sm:$0xff]
    %v78 = vld [vmem:[#allocation5 + $0x18] sm:$0xff]
    %v79 = vld [vmem:[#allocation5 + $0x20] sm:$0xff]
    %v80 = vld [vmem:[#allocation5 + $0x28] sm:$0xff]
    %v81 = vld [vmem:[#allocation5 + $0x30] sm:$0xff]
    %v82 = vld [vmem:[#allocation5 + $0x38] sm:$0xff]
    %v83 = vld [vmem:[#allocation5 + $0x40] sm:$0xff]
    %v84 = vld [vmem:[#allocation5 + $0x48] sm:$0xff]
    %v85 = vld [vmem:[#allocation5 + $0x50] sm:$0xff]
    %v86 = vld [vmem:[#allocation5 + $0x58] sm:$0xff]
    %v87 = vld [vmem:[#allocation5 + $0x60] sm:$0xff]
    %v88 = vld [vmem:[#allocation5 + $0x68] sm:$0xff]
    %v89 = vld [vmem:[#allocation5 + $0x70] sm:$0xff]
    %v90 = vld [vmem:[#allocation5 + $0x78] sm:$0xff]
    %v91 = vlaneseq
    %v92 = vand.u32 %v91, 127
    %s93 = smul.u32 0, 128
    %v94 = vstv %s93
    %v95 = vadd.s32 %v92, %v94
    %vm96 = vcmp.lt.s32.totalorder %v95, 8
    %v97 = vsel %vm96, 1, 0
    %vm98 = vcmp.eq.s32.totalorder %v97, 1
    %v99 = vsel %vm98, %v75, -inf
    %v100 = vsel %vm98, %v76, -inf
    %v101 = vsel %vm98, %v77, -inf
    %v102 = vsel %vm98, %v78, -inf
    %v103 = vsel %vm98, %v79, -inf
    %v104 = vsel %vm98, %v80, -inf
    %v105 = vsel %vm98, %v81, -inf
    %v106 = vsel %vm98, %v82, -inf
    %v107 = vsel %vm98, %v83, -inf
    %v108 = vsel %vm98, %v84, -inf
    %v109 = vsel %vm98, %v85, -inf
    %v110 = vsel %vm98, %v86, -inf
    %v111 = vsel %vm98, %v87, -inf
    %v112 = vsel %vm98, %v88, -inf
    %v113 = vsel %vm98, %v89, -inf
    %v114 = vsel %vm98, %v90, -inf
    %115 = vmax.xlane.f32.xlu0 %v99
    %v116 = vpop.xlane.xlu0 %115
    %117 = vmax.xlane.f32.xlu0 %v100
    %v118 = vpop.xlane.xlu0 %117
    %119 = vmax.xlane.f32.xlu0 %v101
    %v120 = vpop.xlane.xlu0 %119
    %121 = vmax.xlane.f32.xlu0 %v102
    %v122 = vpop.xlane.xlu0 %121
    %123 = vmax.xlane.f32.xlu0 %v103
    %v124 = vpop.xlane.xlu0 %123
    %125 = vmax.xlane.f32.xlu0 %v104
    %v126 = vpop.xlane.xlu0 %125
    %127 = vmax.xlane.f32.xlu0 %v105
    %v128 = vpop.xlane.xlu0 %127
    %129 = vmax.xlane.f32.xlu0 %v106
    %v130 = vpop.xlane.xlu0 %129
    %131 = vmax.xlane.f32.xlu0 %v107
    %v132 = vpop.xlane.xlu0 %131
    %133 = vmax.xlane.f32.xlu0 %v108
    %v134 = vpop.xlane.xlu0 %133
    %135 = vmax.xlane.f32.xlu0 %v109
    %v136 = vpop.xlane.xlu0 %135
    %137 = vmax.xlane.f32.xlu0 %v110
    %v138 = vpop.xlane.xlu0 %137
    %139 = vmax.xlane.f32.xlu0 %v111
    %v140 = vpop.xlane.xlu0 %139
    %141 = vmax.xlane.f32.xlu0 %v112
    %v142 = vpop.xlane.xlu0 %141
    %143 = vmax.xlane.f32.xlu0 %v113
    %v144 = vpop.xlane.xlu0 %143
    %145 = vmax.xlane.f32.xlu0 %v114
    %v146 = vpop.xlane.xlu0 %145
    %v147 = vld [vmem:[#allocation2] sm:$0xff]
    %v148 = vld [vmem:[#allocation2 + $0x8] sm:$0xff]
    %v149 = vld [vmem:[#allocation2 + $0x10] sm:$0xff]
    %v150 = vld [vmem:[#allocation2 + $0x18] sm:$0xff]
    %v151 = vld [vmem:[#allocation2 + $0x20] sm:$0xff]
    %v152 = vld [vmem:[#allocation2 + $0x28] sm:$0xff]
    %v153 = vld [vmem:[#allocation2 + $0x30] sm:$0xff]
    %v154 = vld [vmem:[#allocation2 + $0x38] sm:$0xff]
    %v155 = vld [vmem:[#allocation2 + $0x40] sm:$0xff]
    %v156 = vld [vmem:[#allocation2 + $0x48] sm:$0xff]
    %v157 = vld [vmem:[#allocation2 + $0x50] sm:$0xff]
    %v158 = vld [vmem:[#allocation2 + $0x58] sm:$0xff]
    %v159 = vld [vmem:[#allocation2 + $0x60] sm:$0xff]
    %v160 = vld [vmem:[#allocation2 + $0x68] sm:$0xff]
    %v161 = vld [vmem:[#allocation2 + $0x70] sm:$0xff]
    %v162 = vld [vmem:[#allocation2 + $0x78] sm:$0xff]
    %v163 = vmax.f32 %v147, %v116
    %v164 = vmax.f32 %v148, %v118
    %v165 = vmax.f32 %v149, %v120
    %v166 = vmax.f32 %v150, %v122
    %v167 = vmax.f32 %v151, %v124
    %v168 = vmax.f32 %v152, %v126
    %v169 = vmax.f32 %v153, %v128
    %v170 = vmax.f32 %v154, %v130
    %v171 = vmax.f32 %v155, %v132
    %v172 = vmax.f32 %v156, %v134
    %v173 = vmax.f32 %v157, %v136
    %v174 = vmax.f32 %v158, %v138
    %v175 = vmax.f32 %v159, %v140
    %v176 = vmax.f32 %v160, %v142
    %v177 = vmax.f32 %v161, %v144
    %v178 = vmax.f32 %v162, %v146
    %v179 = vsub.f32 %v147, %v163
    %v180 = vsub.f32 %v148, %v164
    %v181 = vsub.f32 %v149, %v165
    %v182 = vsub.f32 %v150, %v166
    %v183 = vsub.f32 %v151, %v167
    %v184 = vsub.f32 %v152, %v168
    %v185 = vsub.f32 %v153, %v169
    %v186 = vsub.f32 %v154, %v170
    %v187 = vsub.f32 %v155, %v171
    %v188 = vsub.f32 %v156, %v172
    %v189 = vsub.f32 %v157, %v173
    %v190 = vsub.f32 %v158, %v174
    %v191 = vsub.f32 %v159, %v175
    %v192 = vsub.f32 %v160, %v176
    %v193 = vsub.f32 %v161, %v177
    %v194 = vsub.f32 %v162, %v178
    %v195 = vmul.f32 %v179, 1.442695
    %v196 = vpow.pop %v195
    %v197 = vmul.f32 %v180, 1.442695
    %v198 = vpow.pop %v197
    %v199 = vmul.f32 %v181, 1.442695
    %v200 = vpow.pop %v199
    %v201 = vmul.f32 %v182, 1.442695
    %v202 = vpow.pop %v201
    %v203 = vmul.f32 %v183, 1.442695
    %v204 = vpow.pop %v203
    %v205 = vmul.f32 %v184, 1.442695
    %v206 = vpow.pop %v205
    %v207 = vmul.f32 %v185, 1.442695
    %v208 = vpow.pop %v207
    %v209 = vmul.f32 %v186, 1.442695
    %v210 = vpow.pop %v209
    %v211 = vmul.f32 %v187, 1.442695
    %v212 = vpow.pop %v211
    %v213 = vmul.f32 %v188, 1.442695
    %v214 = vpow.pop %v213
    %v215 = vmul.f32 %v189, 1.442695
    %v216 = vpow.pop %v215
    %v217 = vmul.f32 %v190, 1.442695
    %v218 = vpow.pop %v217
    %v219 = vmul.f32 %v191, 1.442695
    %v220 = vpow.pop %v219
    %v221 = vmul.f32 %v192, 1.442695
    %v222 = vpow.pop %v221
    %v223 = vmul.f32 %v193, 1.442695
    %v224 = vpow.pop %v223
    %v225 = vmul.f32 %v194, 1.442695
    %v226 = vpow.pop %v225
    %228 = vset.pattern.permute.xlu0 0
    %229 = vperm.xlu0 %228, %v163
    %v230 = vpop.permute.xlu0 %229
    %233 = vset.pattern.permute.xlu0 0
    %234 = vperm.xlu0 %233, %v164
    %v235 = vpop.permute.xlu0 %234
    %238 = vset.pattern.permute.xlu0 0
    %239 = vperm.xlu0 %238, %v165
    %v240 = vpop.permute.xlu0 %239
    %243 = vset.pattern.permute.xlu0 0
    %244 = vperm.xlu0 %243, %v166
    %v245 = vpop.permute.xlu0 %244
    %248 = vset.pattern.permute.xlu0 0
    %249 = vperm.xlu0 %248, %v167
    %v250 = vpop.permute.xlu0 %249
    %253 = vset.pattern.permute.xlu0 0
    %254 = vperm.xlu0 %253, %v168
    %v255 = vpop.permute.xlu0 %254
    %258 = vset.pattern.permute.xlu0 0
    %259 = vperm.xlu0 %258, %v169
    %v260 = vpop.permute.xlu0 %259
    %263 = vset.pattern.permute.xlu0 0
    %264 = vperm.xlu0 %263, %v170
    %v265 = vpop.permute.xlu0 %264
    %268 = vset.pattern.permute.xlu0 0
    %269 = vperm.xlu0 %268, %v171
    %v270 = vpop.permute.xlu0 %269
    %273 = vset.pattern.permute.xlu0 0
    %274 = vperm.xlu0 %273, %v172
    %v275 = vpop.permute.xlu0 %274
    %278 = vset.pattern.permute.xlu0 0
    %279 = vperm.xlu0 %278, %v173
    %v280 = vpop.permute.xlu0 %279
    %283 = vset.pattern.permute.xlu0 0
    %284 = vperm.xlu0 %283, %v174
    %v285 = vpop.permute.xlu0 %284
    %288 = vset.pattern.permute.xlu0 0
    %289 = vperm.xlu0 %288, %v175
    %v290 = vpop.permute.xlu0 %289
    %293 = vset.pattern.permute.xlu0 0
    %294 = vperm.xlu0 %293, %v176
    %v295 = vpop.permute.xlu0 %294
    %298 = vset.pattern.permute.xlu0 0
    %299 = vperm.xlu0 %298, %v177
    %v300 = vpop.permute.xlu0 %299
    %303 = vset.pattern.permute.xlu0 0
    %304 = vperm.xlu0 %303, %v178
    %v305 = vpop.permute.xlu0 %304
    %v307 = vsub.f32 %v99, %v230
    %v308 = vsub.f32 %v100, %v235
    %v309 = vsub.f32 %v101, %v240
    %v310 = vsub.f32 %v102, %v245
    %v311 = vsub.f32 %v103, %v250
    %v312 = vsub.f32 %v104, %v255
    %v313 = vsub.f32 %v105, %v260
    %v314 = vsub.f32 %v106, %v265
    %v315 = vsub.f32 %v107, %v270
    %v316 = vsub.f32 %v108, %v275
    %v317 = vsub.f32 %v109, %v280
    %v318 = vsub.f32 %v110, %v285
    %v319 = vsub.f32 %v111, %v290
    %v320 = vsub.f32 %v112, %v295
    %v321 = vsub.f32 %v113, %v300
    %v322 = vsub.f32 %v114, %v305
    %v323 = vmul.f32 %v307, 1.442695
    %v324 = vpow.pop %v323
    %v325 = vmul.f32 %v308, 1.442695
    %v326 = vpow.pop %v325
    %v327 = vmul.f32 %v309, 1.442695
    %v328 = vpow.pop %v327
    %v329 = vmul.f32 %v310, 1.442695
    %v330 = vpow.pop %v329
    %v331 = vmul.f32 %v311, 1.442695
    %v332 = vpow.pop %v331
    %v333 = vmul.f32 %v312, 1.442695
    %v334 = vpow.pop %v333
    %v335 = vmul.f32 %v313, 1.442695
    %v336 = vpow.pop %v335
    %v337 = vmul.f32 %v314, 1.442695
    %v338 = vpow.pop %v337
    %v339 = vmul.f32 %v315, 1.442695
    %v340 = vpow.pop %v339
    %v341 = vmul.f32 %v316, 1.442695
    %v342 = vpow.pop %v341
    %v343 = vmul.f32 %v317, 1.442695
    %v344 = vpow.pop %v343
    %v345 = vmul.f32 %v318, 1.442695
    %v346 = vpow.pop %v345
    %v347 = vmul.f32 %v319, 1.442695
    %v348 = vpow.pop %v347
    %v349 = vmul.f32 %v320, 1.442695
    %v350 = vpow.pop %v349
    %v351 = vmul.f32 %v321, 1.442695
    %v352 = vpow.pop %v351
    %v353 = vmul.f32 %v322, 1.442695
    %v354 = vpow.pop %v353
    %v355 = vld [vmem:[#allocation3] sm:$0xff]
    %v356 = vld [vmem:[#allocation3 + $0x8] sm:$0xff]
    %v357 = vld [vmem:[#allocation3 + $0x10] sm:$0xff]
    %v358 = vld [vmem:[#allocation3 + $0x18] sm:$0xff]
    %v359 = vld [vmem:[#allocation3 + $0x20] sm:$0xff]
    %v360 = vld [vmem:[#allocation3 + $0x28] sm:$0xff]
    %v361 = vld [vmem:[#allocation3 + $0x30] sm:$0xff]
    %v362 = vld [vmem:[#allocation3 + $0x38] sm:$0xff]
    %v363 = vld [vmem:[#allocation3 + $0x40] sm:$0xff]
    %v364 = vld [vmem:[#allocation3 + $0x48] sm:$0xff]
    %v365 = vld [vmem:[#allocation3 + $0x50] sm:$0xff]
    %v366 = vld [vmem:[#allocation3 + $0x58] sm:$0xff]
    %v367 = vld [vmem:[#allocation3 + $0x60] sm:$0xff]
    %v368 = vld [vmem:[#allocation3 + $0x68] sm:$0xff]
    %v369 = vld [vmem:[#allocation3 + $0x70] sm:$0xff]
    %v370 = vld [vmem:[#allocation3 + $0x78] sm:$0xff]
    %v371 = vmul.f32 %v196, %v355
    %v372 = vmul.f32 %v198, %v356
    %v373 = vmul.f32 %v200, %v357
    %v374 = vmul.f32 %v202, %v358
    %v375 = vmul.f32 %v204, %v359
    %v376 = vmul.f32 %v206, %v360
    %v377 = vmul.f32 %v208, %v361
    %v378 = vmul.f32 %v210, %v362
    %v379 = vmul.f32 %v212, %v363
    %v380 = vmul.f32 %v214, %v364
    %v381 = vmul.f32 %v216, %v365
    %v382 = vmul.f32 %v218, %v366
    %v383 = vmul.f32 %v220, %v367
    %v384 = vmul.f32 %v222, %v368
    %v385 = vmul.f32 %v224, %v369
    %v386 = vmul.f32 %v226, %v370
    %387 = vadd.xlane.f32.xlu0 %v324
    %v388 = vpop.xlane.xlu0 %387
    %389 = vadd.xlane.f32.xlu0 %v326
    %v390 = vpop.xlane.xlu0 %389
    %391 = vadd.xlane.f32.xlu0 %v328
    %v392 = vpop.xlane.xlu0 %391
    %393 = vadd.xlane.f32.xlu0 %v330
    %v394 = vpop.xlane.xlu0 %393
    %395 = vadd.xlane.f32.xlu0 %v332
    %v396 = vpop.xlane.xlu0 %395
    %397 = vadd.xlane.f32.xlu0 %v334
    %v398 = vpop.xlane.xlu0 %397
    %399 = vadd.xlane.f32.xlu0 %v336
    %v400 = vpop.xlane.xlu0 %399
    %401 = vadd.xlane.f32.xlu0 %v338
    %v402 = vpop.xlane.xlu0 %401
    %403 = vadd.xlane.f32.xlu0 %v340
    %v404 = vpop.xlane.xlu0 %403
    %405 = vadd.xlane.f32.xlu0 %v342
    %v406 = vpop.xlane.xlu0 %405
    %407 = vadd.xlane.f32.xlu0 %v344
    %v408 = vpop.xlane.xlu0 %407
    %409 = vadd.xlane.f32.xlu0 %v346
    %v410 = vpop.xlane.xlu0 %409
    %411 = vadd.xlane.f32.xlu0 %v348
    %v412 = vpop.xlane.xlu0 %411
    %413 = vadd.xlane.f32.xlu0 %v350
    %v414 = vpop.xlane.xlu0 %413
    %415 = vadd.xlane.f32.xlu0 %v352
    %v416 = vpop.xlane.xlu0 %415
    %417 = vadd.xlane.f32.xlu0 %v354
    %v418 = vpop.xlane.xlu0 %417
    %v419 = vadd.f32 %v371, %v388
    %v420 = vadd.f32 %v372, %v390
    %v421 = vadd.f32 %v373, %v392
    %v422 = vadd.f32 %v374, %v394
    %v423 = vadd.f32 %v375, %v396
    %v424 = vadd.f32 %v376, %v398
    %v425 = vadd.f32 %v377, %v400
    %v426 = vadd.f32 %v378, %v402
    %v427 = vadd.f32 %v379, %v404
    %v428 = vadd.f32 %v380, %v406
    %v429 = vadd.f32 %v381, %v408
    %v430 = vadd.f32 %v382, %v410
    %v431 = vadd.f32 %v383, %v412
    %v432 = vadd.f32 %v384, %v414
    %v433 = vadd.f32 %v385, %v416
    %v434 = vadd.f32 %v386, %v418
    %vm435 = vcmask 7168
    %436 = vst.msk [vmem:[#allocation3] sm:$0xff] %vm435, %v419
    %437 = vst.msk [vmem:[#allocation3 + $0x8] sm:$0xff] %vm435, %v420
    %438 = vst.msk [vmem:[#allocation3 + $0x10] sm:$0xff] %vm435, %v421
    %439 = vst.msk [vmem:[#allocation3 + $0x18] sm:$0xff] %vm435, %v422
    %440 = vst.msk [vmem:[#allocation3 + $0x20] sm:$0xff] %vm435, %v423
    %441 = vst.msk [vmem:[#allocation3 + $0x28] sm:$0xff] %vm435, %v424
    %442 = vst.msk [vmem:[#allocation3 + $0x30] sm:$0xff] %vm435, %v425
    %443 = vst.msk [vmem:[#allocation3 + $0x38] sm:$0xff] %vm435, %v426
    %444 = vst.msk [vmem:[#allocation3 + $0x40] sm:$0xff] %vm435, %v427
    %445 = vst.msk [vmem:[#allocation3 + $0x48] sm:$0xff] %vm435, %v428
    %446 = vst.msk [vmem:[#allocation3 + $0x50] sm:$0xff] %vm435, %v429
    %447 = vst.msk [vmem:[#allocation3 + $0x58] sm:$0xff] %vm435, %v430
    %448 = vst.msk [vmem:[#allocation3 + $0x60] sm:$0xff] %vm435, %v431
    %449 = vst.msk [vmem:[#allocation3 + $0x68] sm:$0xff] %vm435, %v432
    %450 = vst.msk [vmem:[#allocation3 + $0x70] sm:$0xff] %vm435, %v433
    %451 = vst.msk [vmem:[#allocation3 + $0x78] sm:$0xff] %vm435, %v434
    %452 = vst.msk [vmem:[#allocation2] sm:$0xff] %vm435, %v163
    %453 = vst.msk [vmem:[#allocation2 + $0x8] sm:$0xff] %vm435, %v164
    %454 = vst.msk [vmem:[#allocation2 + $0x10] sm:$0xff] %vm435, %v165
    %455 = vst.msk [vmem:[#allocation2 + $0x18] sm:$0xff] %vm435, %v166
    %456 = vst.msk [vmem:[#allocation2 + $0x20] sm:$0xff] %vm435, %v167
    %457 = vst.msk [vmem:[#allocation2 + $0x28] sm:$0xff] %vm435, %v168
    %458 = vst.msk [vmem:[#allocation2 + $0x30] sm:$0xff] %vm435, %v169
    %459 = vst.msk [vmem:[#allocation2 + $0x38] sm:$0xff] %vm435, %v170
    %460 = vst.msk [vmem:[#allocation2 + $0x40] sm:$0xff] %vm435, %v171
    %461 = vst.msk [vmem:[#allocation2 + $0x48] sm:$0xff] %vm435, %v172
    %462 = vst.msk [vmem:[#allocation2 + $0x50] sm:$0xff] %vm435, %v173
    %463 = vst.msk [vmem:[#allocation2 + $0x58] sm:$0xff] %vm435, %v174
    %464 = vst.msk [vmem:[#allocation2 + $0x60] sm:$0xff] %vm435, %v175
    %465 = vst.msk [vmem:[#allocation2 + $0x68] sm:$0xff] %vm435, %v176
    %466 = vst.msk [vmem:[#allocation2 + $0x70] sm:$0xff] %vm435, %v177
    %467 = vst.msk [vmem:[#allocation2 + $0x78] sm:$0xff] %vm435, %v178
    %p468 = scmp.eq.s32.totalorder 0, 0
    // Predicated region
    $region14: #{tpu_custom_call.1} parent=1 // pred_check
      %p469 = pneg %p468
    $region15: #{tpu_custom_call.1} parent=1 // pred_check_branch
      %471 = sbr.rel (%p469) target = $region17
    $region16: #{tpu_custom_call.1} parent=1 // pred_region
      %v472 = vlaneseq
      %v473 = vshrl.u32 %v472, 7
      %v474 = vadd.s32 %v473, 8
      %v475 = vadd.s32 %v473, 16
      %v476 = vadd.s32 %v473, 24
      %v477 = vadd.s32 %v473, 32
      %v478 = vadd.s32 %v473, 40
      %v479 = vadd.s32 %v473, 48
      %v480 = vadd.s32 %v473, 56
      %v481 = vadd.s32 %v473, 64
      %v482 = vadd.s32 %v473, 72
      %v483 = vadd.s32 %v473, 80
      %v484 = vadd.s32 %v473, 88
      %v485 = vadd.s32 %v473, 96
      %v486 = vadd.s32 %v473, 104
      %v487 = vadd.s32 %v473, 112
      %v488 = vadd.s32 %v473, 120
      %vm489 = vcmp.eq.s32.totalorder %v473, %v92
      %vm490 = vcmp.eq.s32.totalorder %v474, %v92
      %vm491 = vcmp.eq.s32.totalorder %v475, %v92
      %vm492 = vcmp.eq.s32.totalorder %v476, %v92
      %vm493 = vcmp.eq.s32.totalorder %v477, %v92
      %vm494 = vcmp.eq.s32.totalorder %v478, %v92
      %vm495 = vcmp.eq.s32.totalorder %v479, %v92
      %vm496 = vcmp.eq.s32.totalorder %v480, %v92
      %vm497 = vcmp.eq.s32.totalorder %v481, %v92
      %vm498 = vcmp.eq.s32.totalorder %v482, %v92
      %vm499 = vcmp.eq.s32.totalorder %v483, %v92
      %vm500 = vcmp.eq.s32.totalorder %v484, %v92
      %vm501 = vcmp.eq.s32.totalorder %v485, %v92
      %vm502 = vcmp.eq.s32.totalorder %v486, %v92
      %vm503 = vcmp.eq.s32.totalorder %v487, %v92
      %vm504 = vcmp.eq.s32.totalorder %v488, %v92
      %v505 = vsel %vm489, %v75, 0.0
      %v506 = vsel %vm490, %v76, 0.0
      %v507 = vsel %vm491, %v77, 0.0
      %v508 = vsel %vm492, %v78, 0.0
      %v509 = vsel %vm493, %v79, 0.0
      %v510 = vsel %vm494, %v80, 0.0
      %v511 = vsel %vm495, %v81, 0.0
      %v512 = vsel %vm496, %v82, 0.0
      %v513 = vsel %vm497, %v83, 0.0
      %v514 = vsel %vm498, %v84, 0.0
      %v515 = vsel %vm499, %v85, 0.0
      %v516 = vsel %vm500, %v86, 0.0
      %v517 = vsel %vm501, %v87, 0.0
      %v518 = vsel %vm502, %v88, 0.0
      %v519 = vsel %vm503, %v89, 0.0
      %v520 = vsel %vm504, %v90, 0.0
      %521 = vadd.xlane.f32.xlu0 %v505
      %v522 = vpop.xlane.xlu0 %521
      %523 = vadd.xlane.f32.xlu0 %v506
      %v524 = vpop.xlane.xlu0 %523
      %525 = vadd.xlane.f32.xlu0 %v507
      %v526 = vpop.xlane.xlu0 %525
      %527 = vadd.xlane.f32.xlu0 %v508
      %v528 = vpop.xlane.xlu0 %527
      %529 = vadd.xlane.f32.xlu0 %v509
      %v530 = vpop.xlane.xlu0 %529
      %531 = vadd.xlane.f32.xlu0 %v510
      %v532 = vpop.xlane.xlu0 %531
      %533 = vadd.xlane.f32.xlu0 %v511
      %v534 = vpop.xlane.xlu0 %533
      %535 = vadd.xlane.f32.xlu0 %v512
      %v536 = vpop.xlane.xlu0 %535
      %537 = vadd.xlane.f32.xlu0 %v513
      %v538 = vpop.xlane.xlu0 %537
      %539 = vadd.xlane.f32.xlu0 %v514
      %v540 = vpop.xlane.xlu0 %539
      %541 = vadd.xlane.f32.xlu0 %v515
      %v542 = vpop.xlane.xlu0 %541
      %543 = vadd.xlane.f32.xlu0 %v516
      %v544 = vpop.xlane.xlu0 %543
      %545 = vadd.xlane.f32.xlu0 %v517
      %v546 = vpop.xlane.xlu0 %545
      %547 = vadd.xlane.f32.xlu0 %v518
      %v548 = vpop.xlane.xlu0 %547
      %549 = vadd.xlane.f32.xlu0 %v519
      %v550 = vpop.xlane.xlu0 %549
      %551 = vadd.xlane.f32.xlu0 %v520
      %v552 = vpop.xlane.xlu0 %551
      %553 = vst.msk [vmem:[#allocation4] sm:$0xff] %vm435, %v522
      %554 = vst.msk [vmem:[#allocation4 + $0x8] sm:$0xff] %vm435, %v524
      %555 = vst.msk [vmem:[#allocation4 + $0x10] sm:$0xff] %vm435, %v526
      %556 = vst.msk [vmem:[#allocation4 + $0x18] sm:$0xff] %vm435, %v528
      %557 = vst.msk [vmem:[#allocation4 + $0x20] sm:$0xff] %vm435, %v530
      %558 = vst.msk [vmem:[#allocation4 + $0x28] sm:$0xff] %vm435, %v532
      %559 = vst.msk [vmem:[#allocation4 + $0x30] sm:$0xff] %vm435, %v534
      %560 = vst.msk [vmem:[#allocation4 + $0x38] sm:$0xff] %vm435, %v536
      %561 = vst.msk [vmem:[#allocation4 + $0x40] sm:$0xff] %vm435, %v538
      %562 = vst.msk [vmem:[#allocation4 + $0x48] sm:$0xff] %vm435, %v540
      %563 = vst.msk [vmem:[#allocation4 + $0x50] sm:$0xff] %vm435, %v542
      %564 = vst.msk [vmem:[#allocation4 + $0x58] sm:$0xff] %vm435, %v544
      %565 = vst.msk [vmem:[#allocation4 + $0x60] sm:$0xff] %vm435, %v546
      %566 = vst.msk [vmem:[#allocation4 + $0x68] sm:$0xff] %vm435, %v548
      %567 = vst.msk [vmem:[#allocation4 + $0x70] sm:$0xff] %vm435, %v550
      %568 = vst.msk [vmem:[#allocation4 + $0x78] sm:$0xff] %vm435, %v552
    $region17: #{tpu_custom_call.1} parent=1 // pred_fallthru
      _
    // Predicated region
    $region18: #{tpu_custom_call.1} parent=1 // pred_check
      %p569 = pneg %p22
    $region19: #{tpu_custom_call.1} parent=1 // pred_check_branch
      %571 = sbr.rel (%p569) target = $region21
    $region20: #{tpu_custom_call.1} parent=1 // pred_region
      %v572 = vld [vmem:[#allocation3] sm:$0xff]
      %v573 = vld [vmem:[#allocation3 + $0x8] sm:$0xff]
      %v574 = vld [vmem:[#allocation3 + $0x10] sm:$0xff]
      %v575 = vld [vmem:[#allocation3 + $0x18] sm:$0xff]
      %v576 = vld [vmem:[#allocation3 + $0x20] sm:$0xff]
      %v577 = vld [vmem:[#allocation3 + $0x28] sm:$0xff]
      %v578 = vld [vmem:[#allocation3 + $0x30] sm:$0xff]
      %v579 = vld [vmem:[#allocation3 + $0x38] sm:$0xff]
      %v580 = vld [vmem:[#allocation3 + $0x40] sm:$0xff]
      %v581 = vld [vmem:[#allocation3 + $0x48] sm:$0xff]
      %v582 = vld [vmem:[#allocation3 + $0x50] sm:$0xff]
      %v583 = vld [vmem:[#allocation3 + $0x58] sm:$0xff]
      %v584 = vld [vmem:[#allocation3 + $0x60] sm:$0xff]
      %v585 = vld [vmem:[#allocation3 + $0x68] sm:$0xff]
      %v586 = vld [vmem:[#allocation3 + $0x70] sm:$0xff]
      %v587 = vld [vmem:[#allocation3 + $0x78] sm:$0xff]
      %v588 = vlog2.pop %v572
      %v589 = vmul.f32 %v588, 0.6931472
      %v590 = vlog2.pop %v573
      %v591 = vmul.f32 %v590, 0.6931472
      %v592 = vlog2.pop %v574
      %v593 = vmul.f32 %v592, 0.6931472
      %v594 = vlog2.pop %v575
      %v595 = vmul.f32 %v594, 0.6931472
      %v596 = vlog2.pop %v576
      %v597 = vmul.f32 %v596, 0.6931472
      %v598 = vlog2.pop %v577
      %v599 = vmul.f32 %v598, 0.6931472
      %v600 = vlog2.pop %v578
      %v601 = vmul.f32 %v600, 0.6931472
      %v602 = vlog2.pop %v579
      %v603 = vmul.f32 %v602, 0.6931472
      %v604 = vlog2.pop %v580
      %v605 = vmul.f32 %v604, 0.6931472
      %v606 = vlog2.pop %v581
      %v607 = vmul.f32 %v606, 0.6931472
      %v608 = vlog2.pop %v582
      %v609 = vmul.f32 %v608, 0.6931472
      %v610 = vlog2.pop %v583
      %v611 = vmul.f32 %v610, 0.6931472
      %v612 = vlog2.pop %v584
      %v613 = vmul.f32 %v612, 0.6931472
      %v614 = vlog2.pop %v585
      %v615 = vmul.f32 %v614, 0.6931472
      %v616 = vlog2.pop %v586
      %v617 = vmul.f32 %v616, 0.6931472
      %v618 = vlog2.pop %v587
      %v619 = vmul.f32 %v618, 0.6931472
      %v620 = vld [vmem:[#allocation2] sm:$0xff]
      %v621 = vld [vmem:[#allocation2 + $0x8] sm:$0xff]
      %v622 = vld [vmem:[#allocation2 + $0x10] sm:$0xff]
      %v623 = vld [vmem:[#allocation2 + $0x18] sm:$0xff]
      %v624 = vld [vmem:[#allocation2 + $0x20] sm:$0xff]
      %v625 = vld [vmem:[#allocation2 + $0x28] sm:$0xff]
      %v626 = vld [vmem:[#allocation2 + $0x30] sm:$0xff]
      %v627 = vld [vmem:[#allocation2 + $0x38] sm:$0xff]
      %v628 = vld [vmem:[#allocation2 + $0x40] sm:$0xff]
      %v629 = vld [vmem:[#allocation2 + $0x48] sm:$0xff]
      %v630 = vld [vmem:[#allocation2 + $0x50] sm:$0xff]
      %v631 = vld [vmem:[#allocation2 + $0x58] sm:$0xff]
      %v632 = vld [vmem:[#allocation2 + $0x60] sm:$0xff]
      %v633 = vld [vmem:[#allocation2 + $0x68] sm:$0xff]
      %v634 = vld [vmem:[#allocation2 + $0x70] sm:$0xff]
      %v635 = vld [vmem:[#allocation2 + $0x78] sm:$0xff]
      %v636 = vadd.f32 %v589, %v620
      %v637 = vadd.f32 %v591, %v621
      %v638 = vadd.f32 %v593, %v622
      %v639 = vadd.f32 %v595, %v623
      %v640 = vadd.f32 %v597, %v624
      %v641 = vadd.f32 %v599, %v625
      %v642 = vadd.f32 %v601, %v626
      %v643 = vadd.f32 %v603, %v627
      %v644 = vadd.f32 %v605, %v628
      %v645 = vadd.f32 %v607, %v629
      %v646 = vadd.f32 %v609, %v630
      %v647 = vadd.f32 %v611, %v631
      %v648 = vadd.f32 %v613, %v632
      %v649 = vadd.f32 %v615, %v633
      %v650 = vadd.f32 %v617, %v634
      %v651 = vadd.f32 %v619, %v635
      %v652 = vld [vmem:[#allocation4] sm:$0xff]
      %v653 = vld [vmem:[#allocation4 + $0x8] sm:$0xff]
      %v654 = vld [vmem:[#allocation4 + $0x10] sm:$0xff]
      %v655 = vld [vmem:[#allocation4 + $0x18] sm:$0xff]
      %v656 = vld [vmem:[#allocation4 + $0x20] sm:$0xff]
      %v657 = vld [vmem:[#allocation4 + $0x28] sm:$0xff]
      %v658 = vld [vmem:[#allocation4 + $0x30] sm:$0xff]
      %v659 = vld [vmem:[#allocation4 + $0x38] sm:$0xff]
      %v660 = vld [vmem:[#allocation4 + $0x40] sm:$0xff]
      %v661 = vld [vmem:[#allocation4 + $0x48] sm:$0xff]
      %v662 = vld [vmem:[#allocation4 + $0x50] sm:$0xff]
      %v663 = vld [vmem:[#allocation4 + $0x58] sm:$0xff]
      %v664 = vld [vmem:[#allocation4 + $0x60] sm:$0xff]
      %v665 = vld [vmem:[#allocation4 + $0x68] sm:$0xff]
      %v666 = vld [vmem:[#allocation4 + $0x70] sm:$0xff]
      %v667 = vld [vmem:[#allocation4 + $0x78] sm:$0xff]
      %v668 = vsub.f32 %v636, %v652
      %v669 = vsub.f32 %v637, %v653
      %v670 = vsub.f32 %v638, %v654
      %v671 = vsub.f32 %v639, %v655
      %v672 = vsub.f32 %v640, %v656
      %v673 = vsub.f32 %v641, %v657
      %v674 = vsub.f32 %v642, %v658
      %v675 = vsub.f32 %v643, %v659
      %v676 = vsub.f32 %v644, %v660
      %v677 = vsub.f32 %v645, %v661
      %v678 = vsub.f32 %v646, %v662
      %v679 = vsub.f32 %v647, %v663
      %v680 = vsub.f32 %v648, %v664
      %v681 = vsub.f32 %v649, %v665
      %v682 = vsub.f32 %v650, %v666
      %v683 = vsub.f32 %v651, %v667
      %684 = vst.msk [vmem:[%s1] sm:$0xff] %vm435, %v668
      %685 = vst.msk [vmem:[%s1 + $0x8] sm:$0xff] %vm435, %v669
      %686 = vst.msk [vmem:[%s1 + $0x10] sm:$0xff] %vm435, %v670
      %687 = vst.msk [vmem:[%s1 + $0x18] sm:$0xff] %vm435, %v671
      %688 = vst.msk [vmem:[%s1 + $0x20] sm:$0xff] %vm435, %v672
      %689 = vst.msk [vmem:[%s1 + $0x28] sm:$0xff] %vm435, %v673
      %690 = vst.msk [vmem:[%s1 + $0x30] sm:$0xff] %vm435, %v674
      %691 = vst.msk [vmem:[%s1 + $0x38] sm:$0xff] %vm435, %v675
      %692 = vst.msk [vmem:[%s1 + $0x40] sm:$0xff] %vm435, %v676
      %693 = vst.msk [vmem:[%s1 + $0x48] sm:$0xff] %vm435, %v677
      %694 = vst.msk [vmem:[%s1 + $0x50] sm:$0xff] %vm435, %v678
      %695 = vst.msk [vmem:[%s1 + $0x58] sm:$0xff] %vm435, %v679
      %696 = vst.msk [vmem:[%s1 + $0x60] sm:$0xff] %vm435, %v680
      %697 = vst.msk [vmem:[%s1 + $0x68] sm:$0xff] %vm435, %v681
      %698 = vst.msk [vmem:[%s1 + $0x70] sm:$0xff] %vm435, %v682
      %699 = vst.msk [vmem:[%s1 + $0x78] sm:$0xff] %vm435, %v683
    $region21: #{tpu_custom_call.1} parent=1 // pred_fallthru
      _
    // Predicated region
    $region22: #{tpu_custom_call.1} parent=1 // pred_check
      _
    $region23: #{tpu_custom_call.1} parent=1 // pred_check_branch
      %701 = sbr.rel (0) target = $region25
    $region24: #{tpu_custom_call.1} parent=1 // pred_region
      _
    $region25: #{tpu_custom_call.1} parent=1 // pred_fallthru
      _
    // Predicated region
    $region26: #{tpu_custom_call.1} parent=1 // pred_check
      _
    $region27: #{tpu_custom_call.1} parent=1 // pred_check_branch
      %703 = sbr.rel (0) target = $region29
    $region28: #{tpu_custom_call.1} parent=1 // pred_region
      _
    $region29: #{tpu_custom_call.1} parent=1 // pred_fallthru
      _
    %704 = vsyncpa [#allocation6], 1

</llo_original>
